<compile_context>
chip_gen: v5e
topology: v5e:2x2
jax: 0.10.0
libtpu: 0.0.40
codegen_flags: <defaults>
</compile_context>

<pallas_src>
import math
from functools import partial

import jax
import jax.numpy as jnp
from jax.experimental import pallas as pl
from jax.experimental.pallas import tpu as pltpu

mm = 1e-3
cm = 1e-2


# --------------------------------------------------------------------------
# Stage 1: batch-invariant {0,1} aperture * quantized-phase mask, (H, W)
# --------------------------------------------------------------------------
def make_mask_kernel(s, c_s, radius):
    """s = tau_max/tau, c_s, radius are Python-float compile-time constants."""

    def kernel(init_mask_ref, gdiff_ref, xs_ref, ys_ref, mask_ref):
        m = init_mask_ref[...]                        # (tile_h, W)
        wrapped = (m + 2.0) % 4.0 - 2.0               # wrap into [-2, 2)

        # score_phase(..., 'sigmoid') * c_s * (tau_max/tau), op-for-op
        # identical to the reference so mask decisions match bit-for-bit
        # up to the Gumbel regrouping below.
        def score(lut_val):
            diff = wrapped - lut_val
            diff = ((diff + 2.0) % 4.0 - 2.0) * 0.5
            sg = jax.nn.sigmoid(s * diff)
            return sg * (1.0 - sg) * 4.0 * c_s * s

        # hard Gumbel-softmax over the 2-entry LUT axis:
        #   argmax((score + g)/tau) == argmax(score + g)   (tau > 0)
        # and only the Gumbel difference g1 - g0 is needed.
        pick_pos = (score(1.0) + gdiff_ref[...]) > score(-1.0)

        # circular aperture on exact linspace coordinates (matches torch/jnp)
        X = xs_ref[...]                               # (tile_h, 1)
        Y = ys_ref[...]                               # (1, W)
        inside = jnp.sqrt(X * X + Y * Y) <= radius

        # aperture * binmask fused into a single select ({0,1} float mask)
        mask_ref[...] = jnp.where(pick_pos & inside, 1.0, 0.0)

    return kernel


def _build_mask(init_mask, g_diff, xs, ys, *, s, c_s, radius):
    H, W = init_mask.shape
    if H <= 512:
        tile_h = H                                    # full extent
    else:
        tile_h = max(8, min(H, (1 << 20) // (4 * W)) // 8 * 8)  # multiple of 8

    kernel = make_mask_kernel(s, c_s, radius)
    return pl.pallas_call(
        kernel,
        out_shape=jax.ShapeDtypeStruct((H, W), jnp.float32),
        grid_spec=pltpu.PrefetchScalarGridSpec(
            num_scalar_prefetch=0,
            grid=(pl.cdiv(H, tile_h),),
            in_specs=[
                pl.BlockSpec((tile_h, W), lambda i: (i, 0)),   # init_mask
                pl.BlockSpec((tile_h, W), lambda i: (i, 0)),   # g1 - g0
                pl.BlockSpec((tile_h, 1), lambda i: (i, 0)),   # x coords
                pl.BlockSpec((1, W), lambda i: (0, 0)),        # y coords
            ],
            out_specs=pl.BlockSpec((tile_h, W), lambda i: (i, 0))),
        compiler_params=pltpu.CompilerParams(
            dimension_semantics=("parallel",)),
    )(init_mask, g_diff, xs, ys)


# --------------------------------------------------------------------------
# Stage 2: lane-dense elementwise modulation of the planar field
# --------------------------------------------------------------------------
def modulate_kernel(mask_ref, fr_ref, fi_ref, or_ref, oi_ref):
    # HBM-DMA bound (1 mul per 16 bytes moved); do not micro-optimize VPU side.
    m = mask_ref[...]                                 # (1, tile_c) -> broadcast
    or_ref[...] = fr_ref[...] * m
    oi_ref[...] = fi_ref[...] * m


def _stage2_budget():
    """Per-generation stage-2 block budget & scoped-VMEM limit (bytes).

    Live VMEM ~= 4 field blocks x 2 pipeline buffers + 2 mask stripes
    (<= ~10 blocks), kept comfortably under the chosen vmem_limit on every
    generation (v5e/v6e 128 MiB physical, v7x 64 MiB per TensorCore).
    """
    try:
        cap = int(pltpu.get_tpu_info().vmem_capacity_bytes)
    except Exception:
        cap = None
    if cap is None:                         # unknown generation: conservative
        vmem_limit = 40 << 20
        block_budget = 2 << 20
    elif cap <= (96 << 20):                 # v7x-class: 64 MiB per TensorCore
        vmem_limit = min(48 << 20, max(24 << 20, cap - (16 << 20)))
        block_budget = min(3 << 20, vmem_limit // 12)
    else:                                   # v5e / v6e: 128 MiB physical
        vmem_limit = 64 << 20
        block_budget = 4 << 20
    return block_budget, vmem_limit


def _pick_field_tiles(n_rows, n_cols, block_budget_bytes):
    """Lane-dense f32 field tiles under a per-block VMEM budget."""
    bytes_per_row = 4 * n_cols
    if n_rows * bytes_per_row <= block_budget_bytes:
        return n_rows, n_cols                         # whole field in one block
    if 8 * bytes_per_row <= block_budget_bytes:
        tile_r = (block_budget_bytes // bytes_per_row) // 8 * 8   # mult of 8
        if tile_r >= n_rows:
            return n_rows, n_cols
        return tile_r, n_cols                         # full rows, tiled batch
    tile_r = n_rows if n_rows < 8 else 8              # full or multiple of 8
    max_c = max(128, block_budget_bytes // (4 * tile_r))
    tile_c = min(n_cols, (max_c // 128) * 128)        # lane-dense mult of 128
    return tile_r, tile_c


@partial(jax.jit, static_argnames=("tau", "tau_max", "c_s", "dx", "dy",
                                   "radius", "donate_field"))
def soft_gumbel_mask_modulate(init_mask, gumbel, field_real, field_imag, *,
                              tau, tau_max, c_s, dx, dy, radius,
                              donate_field=False):
    B, L, H, W = field_real.shape
    s = float(tau_max) / float(tau)                   # tau only enters via s

    # ---- stage 1: one-time (H, W) mask ------------------------------------
    g_diff = gumbel[1] - gumbel[0]                    # single Logistic plane
    xs = jnp.linspace(-dx * H / 2.0, dx * H / 2.0, H,
                      dtype=jnp.float32).reshape(H, 1)
    ys = jnp.linspace(-dy * W / 2.0, dy * W / 2.0, W,
                      dtype=jnp.float32).reshape(1, W)
    mask2d = _build_mask(init_mask, g_diff, xs, ys,
                         s=s, c_s=float(c_s), radius=float(radius))

    # ---- stage 2: streamed, lane-dense modulation --------------------------
    # (For very small fields the mask round-trip/launch could be fused into
    #  this kernel; <1% at production sizes, so the two-kernel split is kept.)
    n_rows, n_cols = B * L, H * W
    mask_flat = mask2d.reshape(1, n_cols)
    fr = field_real.reshape(n_rows, n_cols)
    fi = field_imag.reshape(n_rows, n_cols)

    block_budget, vmem_limit = _stage2_budget()
    tile_r, tile_c = _pick_field_tiles(n_rows, n_cols, block_budget)
    n_rt = pl.cdiv(n_rows, tile_r)
    n_ct = pl.cdiv(n_cols, tile_c)

    # Megacore balance (v7x, 2 TCs): shard the axis with more tiles by
    # putting it outermost.  When columns are outer, the (1, tile_c) mask
    # block index is constant across the inner row steps -> fetched once per
    # column stripe; when rows are outer the extra mask traffic is <= ~3%.
    if n_ct >= n_rt:
        grid = (n_ct, n_rt)
        mask_spec = pl.BlockSpec((1, tile_c), lambda j, i: (0, j))
        fld_spec = pl.BlockSpec((tile_r, tile_c), lambda j, i: (i, j))
    else:
        grid = (n_rt, n_ct)
        mask_spec = pl.BlockSpec((1, tile_c), lambda i, j: (0, j))
        fld_spec = pl.BlockSpec((tile_r, tile_c), lambda i, j: (i, j))

    # Optional buffer reuse when the caller no longer needs the input field.
    io_aliases = {1: 0, 2: 1} if donate_field else {}

    out_r, out_i = pl.pallas_call(
        modulate_kernel,
        out_shape=(jax.ShapeDtypeStruct((n_rows, n_cols), jnp.float32),
                   jax.ShapeDtypeStruct((n_rows, n_cols), jnp.float32)),
        grid_spec=pltpu.PrefetchScalarGridSpec(
            num_scalar_prefetch=0,
            grid=grid,
            in_specs=[mask_spec, fld_spec, fld_spec],
            out_specs=[fld_spec, fld_spec]),
        compiler_params=pltpu.CompilerParams(
            dimension_semantics=("parallel", "parallel"),
            vmem_limit_bytes=int(vmem_limit)),
        cost_estimate=pl.CostEstimate(
            flops=2 * n_rows * n_cols,
            transcendentals=0,
            bytes_accessed=16 * n_rows * n_cols + 4 * n_cols),
        input_output_aliases=io_aliases,
    )(mask_flat, fr, fi)

    # Downstream code should ideally keep the planar/flattened layout (the
    # real headroom is fusing this multiply into the field's producer or
    # consumer); the reshape back is only for interface parity with PyTorch.
    return out_r.reshape(B, L, H, W), out_i.reshape(B, L, H, W)


# --------------------------------------------------------------------------
# Pure-JAX reference of the same forward pass (faithful to the PyTorch code)
# --------------------------------------------------------------------------
def jnp_reference(init_mask, gumbel, field, *, tau, tau_max, c_s, dx, dy, radius):
    H, W = init_mask.shape
    s = tau_max / tau
    wrapped = (init_mask + 2.0) % 4.0 - 2.0
    lut = jnp.array([-1.0, 1.0], jnp.float32)
    diff = wrapped[None] - lut[:, None, None]
    diff = ((diff + 2.0) % 4.0 - 2.0) * 0.5
    sg = jax.nn.sigmoid(s * diff)
    scores = sg * (1.0 - sg) * 4.0 * c_s * s
    logits = (scores + gumbel) / tau
    q = jnp.where(logits[1] > logits[0], 1.0, -1.0)
    binmask = (q + 1.0) * 0.5
    x = jnp.linspace(-dx * H / 2, dx * H / 2, H)
    y = jnp.linspace(-dy * W / 2, dy * W / 2, W)
    X, Y = jnp.meshgrid(x, y, indexing="ij")
    aperture = jnp.where(jnp.sqrt(X**2 + Y**2) <= radius, 1.0, 0.0)
    return field * (aperture * binmask)[None, None, :, :]


if __name__ == "__main__":
    # small shapes: B=2 fields, L=3 wavelengths, 16x16 hologram plane
    B, L, H, W = 2, 3, 16, 16
    dx = dy = 1.0 * cm            # plane length 16 cm > 2 * 7.5 cm radius
    radius = 7.5 * cm
    c_s = 300.0
    tau_min, tau_max = 2.0, 5.5
    iter_frac = 0.3
    r = math.log(tau_max / tau_min)
    tau = max(tau_min, tau_max * math.exp(-r * iter_frac))

    key = jax.random.PRNGKey(0)
    k_mask, k_gumbel, k_fr, k_fi = jax.random.split(key, 4)

    # init_mask parameter: -2 + 4 * U[0,1), (1,1,H,W) -> squeezed to (H,W)
    init_mask = -2.0 + 4.0 * jax.random.uniform(k_mask, (H, W), jnp.float32)
    # Gumbel(0,1) noise for the hard gumbel-softmax over the 2-entry LUT axis
    gumbel = jax.random.gumbel(k_gumbel, (2, H, W), jnp.float32)
    # complex input field (ElectricField.data) kept planar: NCHW (B, L, H, W)
    field_real = jax.random.normal(k_fr, (B, L, H, W), jnp.float32)
    field_imag = jax.random.normal(k_fi, (B, L, H, W), jnp.float32)

    # TODO(synk): num_unit != None branch (_copy_quad_to_full quad-mirrored
    # unit tiling + repeat) not implemented; this covers the num_unit=None path.

    out_r, out_i = soft_gumbel_mask_modulate(
        init_mask, gumbel, field_real, field_imag,
        tau=tau, tau_max=tau_max, c_s=c_s, dx=dx, dy=dy, radius=radius)
    jax.block_until_ready((out_r, out_i))

    # verification against the pure-JAX reference (planar compare, no
    # complex recombine pass on the kernel path)
    field = (field_real + 1j * field_imag).astype(jnp.complex64)
    ref = jnp_reference(init_mask, gumbel, field,
                        tau=tau, tau_max=tau_max, c_s=c_s,
                        dx=dx, dy=dy, radius=radius)
    assert jnp.allclose(out_r, ref.real, atol=1e-5, rtol=1e-5), "real mismatch"
    assert jnp.allclose(out_i, ref.imag, atol=1e-5, rtol=1e-5), "imag mismatch"

    print("KERNEL_OK")
</pallas_src>

<mosaic_0001>
module attributes {stable_mosaic.version = 11 : i64} {
  func.func @modulate_kernel(%arg0: i32, %arg1: i32, %arg2: memref<1x256xf32, #tpu.memory_space<vmem>>, %arg3: memref<6x256xf32, #tpu.memory_space<vmem>>, %arg4: memref<6x256xf32, #tpu.memory_space<vmem>>, %arg5: memref<6x256xf32, #tpu.memory_space<vmem>>, %arg6: memref<6x256xf32, #tpu.memory_space<vmem>>) attributes {dimension_semantics = [#tpu.dimension_semantics<parallel>, #tpu.dimension_semantics<parallel>], iteration_bounds = array<i64: 1, 1>, scalar_prefetch = 0 : i64, scratch_operands = 0 : i64, tpu.core_type = #tpu.core_type<tc>, window_params = [{transform_indices = @transform_0, window_bounds = array<i64: 1, 256>}, {transform_indices = @transform_1, window_bounds = array<i64: 6, 256>}, {transform_indices = @transform_2, window_bounds = array<i64: 6, 256>}, {transform_indices = @transform_3, window_bounds = array<i64: 6, 256>}, {transform_indices = @transform_4, window_bounds = array<i64: 6, 256>}]} {
    %c0 = arith.constant 0 : index
    %c0_0 = arith.constant 0 : index
    %0 = vector.load %arg2[%c0, %c0_0] : memref<1x256xf32, #tpu.memory_space<vmem>>, vector<1x256xf32>
    %c0_1 = arith.constant 0 : index
    %c0_2 = arith.constant 0 : index
    %1 = vector.load %arg3[%c0_1, %c0_2] : memref<6x256xf32, #tpu.memory_space<vmem>>, vector<6x256xf32>
    %2 = vector.broadcast %0 : vector<1x256xf32> to vector<6x256xf32>
    %3 = arith.mulf %1, %2 : vector<6x256xf32>
    %c0_3 = arith.constant 0 : index
    %c0_4 = arith.constant 0 : index
    %4 = vector.load %arg5[%c0_3, %c0_4] : memref<6x256xf32, #tpu.memory_space<vmem>>, vector<6x256xf32>
    tpu.vector_store %arg5[%c0_3, %c0_4], %3 {strides = array<i32>} : memref<6x256xf32, #tpu.memory_space<vmem>>, vector<6x256xf32>,
    %c0_5 = arith.constant 0 : index
    %c0_6 = arith.constant 0 : index
    %5 = vector.load %arg4[%c0_5, %c0_6] : memref<6x256xf32, #tpu.memory_space<vmem>>, vector<6x256xf32>
    %6 = vector.broadcast %0 : vector<1x256xf32> to vector<6x256xf32>
    %7 = arith.mulf %5, %6 : vector<6x256xf32>
    %c0_7 = arith.constant 0 : index
    %c0_8 = arith.constant 0 : index
    %8 = vector.load %arg6[%c0_7, %c0_8] : memref<6x256xf32, #tpu.memory_space<vmem>>, vector<6x256xf32>
    tpu.vector_store %arg6[%c0_7, %c0_8], %7 {strides = array<i32>} : memref<6x256xf32, #tpu.memory_space<vmem>>, vector<6x256xf32>,
    return
  }
  func.func @transform_0(%arg0: i32, %arg1: i32) -> (i32, i32) {
    %c0_i32 = arith.constant 0 : i32
    %c0_i32_0 = arith.constant 0 : i32
    return %c0_i32, %arg0 : i32, i32
  }
  func.func @transform_1(%arg0: i32, %arg1: i32) -> (i32, i32) {
    %c0_i32 = arith.constant 0 : i32
    return %arg1, %arg0 : i32, i32
  }
  func.func @transform_2(%arg0: i32, %arg1: i32) -> (i32, i32) {
    %c0_i32 = arith.constant 0 : i32
    return %arg1, %arg0 : i32, i32
  }
  func.func @transform_3(%arg0: i32, %arg1: i32) -> (i32, i32) {
    %c0_i32 = arith.constant 0 : i32
    return %arg1, %arg0 : i32, i32
  }
  func.func @transform_4(%arg0: i32, %arg1: i32) -> (i32, i32) {
    %c0_i32 = arith.constant 0 : i32
    return %arg1, %arg0 : i32, i32
  }
}

module attributes {stable_mosaic.version = 11 : i64} {
  func.func @kernel(%arg0: i32, %arg1: memref<16x16xf32, #tpu.memory_space<vmem>>, %arg2: memref<16x16xf32, #tpu.memory_space<vmem>>, %arg3: memref<16x1xf32, #tpu.memory_space<vmem>>, %arg4: memref<1x16xf32, #tpu.memory_space<vmem>>, %arg5: memref<16x16xf32, #tpu.memory_space<vmem>>) attributes {dimension_semantics = [#tpu.dimension_semantics<parallel>], iteration_bounds = array<i64: 1>, scalar_prefetch = 0 : i64, scratch_operands = 0 : i64, tpu.core_type = #tpu.core_type<tc>, window_params = [{transform_indices = @transform_0, window_bounds = array<i64: 16, 16>}, {transform_indices = @transform_1, window_bounds = array<i64: 16, 16>}, {transform_indices = @transform_2, window_bounds = array<i64: 16, 1>}, {pipeline_mode = #tpu.pipeline_mode<synchronous>, transform_indices = @transform_3, window_bounds = array<i64: 1, 16>}, {transform_indices = @transform_4, window_bounds = array<i64: 16, 16>}]} {
    %c0 = arith.constant 0 : index
    %c0_0 = arith.constant 0 : index
    %0 = vector.load %arg1[%c0, %c0_0] : memref<16x16xf32, #tpu.memory_space<vmem>>, vector<16x16xf32>
    %cst = arith.constant 2.000000e+00 : f32
    %1 = vector.broadcast %cst : f32 to vector<16x16xf32>
    %2 = arith.addf %0, %1 : vector<16x16xf32>
    %cst_1 = arith.constant 4.000000e+00 : f32
    %3 = vector.broadcast %cst_1 : f32 to vector<16x16xf32>
    %4 = arith.remf %2, %3 : vector<16x16xf32>
    %cst_2 = arith.constant 0.000000e+00 : f32
    %5 = vector.broadcast %cst_2 : f32 to vector<16x16xf32>
    %6 = arith.cmpf one, %4, %5 : vector<16x16xf32>
    %cst_3 = arith.constant 0.000000e+00 : f32
    %7 = vector.broadcast %cst_3 : f32 to vector<16x16xf32>
    %8 = arith.cmpf olt, %4, %7 : vector<16x16xf32>
    %cst_4 = arith.constant 0.000000e+00 : f32
    %9 = arith.cmpf olt, %cst_1, %cst_4 : f32
    %10 = vector.broadcast %9 : i1 to vector<16x16xi1>
    %11 = vector.broadcast %10 : vector<16x16xi1> to vector<16x16xi1>
    %12 = arith.xori %8, %11 : vector<16x16xi1>
    %13 = arith.andi %12, %6 : vector<16x16xi1>
    %14 = vector.broadcast %cst_1 : f32 to vector<16x16xf32>
    %15 = arith.addf %4, %14 : vector<16x16xf32>
    %16 = arith.select %13, %15, %4 : vector<16x16xi1>, vector<16x16xf32>
    %cst_5 = arith.constant 2.000000e+00 : f32
    %17 = vector.broadcast %cst_5 : f32 to vector<16x16xf32>
    %18 = arith.subf %16, %17 : vector<16x16xf32>
    %cst_6 = arith.constant 1.000000e+00 : f32
    %19 = vector.broadcast %cst_6 : f32 to vector<16x16xf32>
    %20 = arith.subf %18, %19 : vector<16x16xf32>
    %cst_7 = arith.constant 2.000000e+00 : f32
    %21 = vector.broadcast %cst_7 : f32 to vector<16x16xf32>
    %22 = arith.addf %20, %21 : vector<16x16xf32>
    %cst_8 = arith.constant 4.000000e+00 : f32
    %23 = vector.broadcast %cst_8 : f32 to vector<16x16xf32>
    %24 = arith.remf %22, %23 : vector<16x16xf32>
    %cst_9 = arith.constant 0.000000e+00 : f32
    %25 = vector.broadcast %cst_9 : f32 to vector<16x16xf32>
    %26 = arith.cmpf one, %24, %25 : vector<16x16xf32>
    %cst_10 = arith.constant 0.000000e+00 : f32
    %27 = vector.broadcast %cst_10 : f32 to vector<16x16xf32>
    %28 = arith.cmpf olt, %24, %27 : vector<16x16xf32>
    %cst_11 = arith.constant 0.000000e+00 : f32
    %29 = arith.cmpf olt, %cst_8, %cst_11 : f32
    %30 = vector.broadcast %29 : i1 to vector<16x16xi1>
    %31 = vector.broadcast %30 : vector<16x16xi1> to vector<16x16xi1>
    %32 = arith.xori %28, %31 : vector<16x16xi1>
    %33 = arith.andi %32, %26 : vector<16x16xi1>
    %34 = vector.broadcast %cst_8 : f32 to vector<16x16xf32>
    %35 = arith.addf %24, %34 : vector<16x16xf32>
    %36 = arith.select %33, %35, %24 : vector<16x16xi1>, vector<16x16xf32>
    %cst_12 = arith.constant 2.000000e+00 : f32
    %37 = vector.broadcast %cst_12 : f32 to vector<16x16xf32>
    %38 = arith.subf %36, %37 : vector<16x16xf32>
    %cst_13 = arith.constant 5.000000e-01 : f32
    %39 = vector.broadcast %cst_13 : f32 to vector<16x16xf32>
    %40 = arith.mulf %38, %39 : vector<16x16xf32>
    %cst_14 = arith.constant 1.35456491 : f32
    %41 = vector.broadcast %cst_14 : f32 to vector<16x16xf32>
    %42 = arith.mulf %41, %40 : vector<16x16xf32>
    %43 = arith.negf %42 : vector<16x16xf32>
    %44 = math.exp %43 : vector<16x16xf32>
    %cst_15 = arith.constant 1.000000e+00 : f32
    %45 = vector.broadcast %cst_15 : f32 to vector<16x16xf32>
    %46 = arith.addf %45, %44 : vector<16x16xf32>
    %47 = arith.divf %45, %46 : vector<16x16xf32>
    %cst_16 = arith.constant 1.000000e+00 : f32
    %48 = vector.broadcast %cst_16 : f32 to vector<16x16xf32>
    %49 = arith.subf %48, %47 : vector<16x16xf32>
    %50 = arith.mulf %47, %49 : vector<16x16xf32>
    %cst_17 = arith.constant 4.000000e+00 : f32
    %51 = vector.broadcast %cst_17 : f32 to vector<16x16xf32>
    %52 = arith.mulf %50, %51 : vector<16x16xf32>
    %cst_18 = arith.constant 3.000000e+02 : f32
    %53 = vector.broadcast %cst_18 : f32 to vector<16x16xf32>
    %54 = arith.mulf %52, %53 : vector<16x16xf32>
    %cst_19 = arith.constant 1.35456491 : f32
    %55 = vector.broadcast %cst_19 : f32 to vector<16x16xf32>
    %56 = arith.mulf %54, %55 : vector<16x16xf32>
    %c0_20 = arith.constant 0 : index
    %c0_21 = arith.constant 0 : index
    %57 = vector.load %arg2[%c0_20, %c0_21] : memref<16x16xf32, #tpu.memory_space<vmem>>, vector<16x16xf32>
    %58 = arith.addf %56, %57 : vector<16x16xf32>
    %cst_22 = arith.constant -1.000000e+00 : f32
    %59 = vector.broadcast %cst_22 : f32 to vector<16x16xf32>
    %60 = arith.subf %18, %59 : vector<16x16xf32>
    %cst_23 = arith.constant 2.000000e+00 : f32
    %61 = vector.broadcast %cst_23 : f32 to vector<16x16xf32>
    %62 = arith.addf %60, %61 : vector<16x16xf32>
    %cst_24 = arith.constant 4.000000e+00 : f32
    %63 = vector.broadcast %cst_24 : f32 to vector<16x16xf32>
    %64 = arith.remf %62, %63 : vector<16x16xf32>
    %cst_25 = arith.constant 0.000000e+00 : f32
    %65 = vector.broadcast %cst_25 : f32 to vector<16x16xf32>
    %66 = arith.cmpf one, %64, %65 : vector<16x16xf32>
    %cst_26 = arith.constant 0.000000e+00 : f32
    %67 = vector.broadcast %cst_26 : f32 to vector<16x16xf32>
    %68 = arith.cmpf olt, %64, %67 : vector<16x16xf32>
    %cst_27 = arith.constant 0.000000e+00 : f32
    %69 = arith.cmpf olt, %cst_24, %cst_27 : f32
    %70 = vector.broadcast %69 : i1 to vector<16x16xi1>
    %71 = vector.broadcast %70 : vector<16x16xi1> to vector<16x16xi1>
    %72 = arith.xori %68, %71 : vector<16x16xi1>
    %73 = arith.andi %72, %66 : vector<16x16xi1>
    %74 = vector.broadcast %cst_24 : f32 to vector<16x16xf32>
    %75 = arith.addf %64, %74 : vector<16x16xf32>
    %76 = arith.select %73, %75, %64 : vector<16x16xi1>, vector<16x16xf32>
    %cst_28 = arith.constant 2.000000e+00 : f32
    %77 = vector.broadcast %cst_28 : f32 to vector<16x16xf32>
    %78 = arith.subf %76, %77 : vector<16x16xf32>
    %cst_29 = arith.constant 5.000000e-01 : f32
    %79 = vector.broadcast %cst_29 : f32 to vector<16x16xf32>
    %80 = arith.mulf %78, %79 : vector<16x16xf32>
    %cst_30 = arith.constant 1.35456491 : f32
    %81 = vector.broadcast %cst_30 : f32 to vector<16x16xf32>
    %82 = arith.mulf %81, %80 : vector<16x16xf32>
    %83 = arith.negf %82 : vector<16x16xf32>
    %84 = math.exp %83 : vector<16x16xf32>
    %cst_31 = arith.constant 1.000000e+00 : f32
    %85 = vector.broadcast %cst_31 : f32 to vector<16x16xf32>
    %86 = arith.addf %85, %84 : vector<16x16xf32>
    %87 = arith.divf %85, %86 : vector<16x16xf32>
    %cst_32 = arith.constant 1.000000e+00 : f32
    %88 = vector.broadcast %cst_32 : f32 to vector<16x16xf32>
    %89 = arith.subf %88, %87 : vector<16x16xf32>
    %90 = arith.mulf %87, %89 : vector<16x16xf32>
    %cst_33 = arith.constant 4.000000e+00 : f32
    %91 = vector.broadcast %cst_33 : f32 to vector<16x16xf32>
    %92 = arith.mulf %90, %91 : vector<16x16xf32>
    %cst_34 = arith.constant 3.000000e+02 : f32
    %93 = vector.broadcast %cst_34 : f32 to vector<16x16xf32>
    %94 = arith.mulf %92, %93 : vector<16x16xf32>
    %cst_35 = arith.constant 1.35456491 : f32
    %95 = vector.broadcast %cst_35 : f32 to vector<16x16xf32>
    %96 = arith.mulf %94, %95 : vector<16x16xf32>
    %97 = arith.cmpf ogt, %58, %96 : vector<16x16xf32>
    %c0_36 = arith.constant 0 : index
    %c0_37 = arith.constant 0 : index
    %98 = vector.load %arg3[%c0_36, %c0_37] : memref<16x1xf32, #tpu.memory_space<vmem>>, vector<16x1xf32>
    %c0_38 = arith.constant 0 : index
    %c0_39 = arith.constant 0 : index
    %99 = vector.load %arg4[%c0_38, %c0_39] : memref<1x16xf32, #tpu.memory_space<vmem>>, vector<1x16xf32>
    %100 = arith.mulf %98, %98 : vector<16x1xf32>
    %101 = arith.mulf %99, %99 : vector<1x16xf32>
    %102 = vector.broadcast %100 : vector<16x1xf32> to vector<16x16xf32>
    %103 = vector.broadcast %101 : vector<1x16xf32> to vector<16x16xf32>
    %104 = arith.addf %102, %103 : vector<16x16xf32>
    %105 = math.sqrt %104 : vector<16x16xf32>
    %cst_40 = arith.constant 7.500000e-02 : f32
    %106 = vector.broadcast %cst_40 : f32 to vector<16x16xf32>
    %107 = arith.cmpf ole, %105, %106 : vector<16x16xf32>
    %108 = arith.andi %97, %107 : vector<16x16xi1>
    %cst_41 = arith.constant 1.000000e+00 : f32
    %cst_42 = arith.constant 0.000000e+00 : f32
    %109 = vector.broadcast %cst_41 : f32 to vector<16x16xf32>
    %110 = vector.broadcast %cst_42 : f32 to vector<16x16xf32>
    %111 = arith.select %108, %109, %110 : vector<16x16xi1>, vector<16x16xf32>
    %c0_43 = arith.constant 0 : index
    %c0_44 = arith.constant 0 : index
    %112 = vector.load %arg5[%c0_43, %c0_44] : memref<16x16xf32, #tpu.memory_space<vmem>>, vector<16x16xf32>
    tpu.vector_store %arg5[%c0_43, %c0_44], %111 {strides = array<i32>} : memref<16x16xf32, #tpu.memory_space<vmem>>, vector<16x16xf32>,
    return
  }
  func.func @transform_0(%arg0: i32) -> (i32, i32) {
    %c0_i32 = arith.constant 0 : i32
    %c0_i32_0 = arith.constant 0 : i32
    return %arg0, %c0_i32 : i32, i32
  }
  func.func @transform_1(%arg0: i32) -> (i32, i32) {
    %c0_i32 = arith.constant 0 : i32
    %c0_i32_0 = arith.constant 0 : i32
    return %arg0, %c0_i32 : i32, i32
  }
  func.func @transform_2(%arg0: i32) -> (i32, i32) {
    %c0_i32 = arith.constant 0 : i32
    %c0_i32_0 = arith.constant 0 : i32
    return %arg0, %c0_i32 : i32, i32
  }
  func.func @transform_3(%arg0: i32) -> (i32, i32) {
    %c0_i32 = arith.constant 0 : i32
    %c0_i32_0 = arith.constant 0 : i32
    %c0_i32_1 = arith.constant 0 : i32
    return %c0_i32, %c0_i32_0 : i32, i32
  }
  func.func @transform_4(%arg0: i32) -> (i32, i32) {
    %c0_i32 = arith.constant 0 : i32
    %c0_i32_0 = arith.constant 0 : i32
    return %arg0, %c0_i32 : i32, i32
  }
}

</mosaic_0001>

<llo_original>
// kernel: soft_gumbel_mask_modulate.3
$region0: #{soft_gumbel_mask_modulate.3}
  #allocation0 [shape = 'u32[]', space=smem, size = 0x4, offset = 0x4, fixed_abs, tag = 'smem constant byte address 0x4 - core index']
  #allocation1 [shape = 'u32[72,128]{1,0:T(1,128)}', space=vmem, size = 0x9000, scoped, tag = 'internal scratch']
  %s0 = inlined_call_operand.vmem [shape: f32[1,256], index: 0, kind: input, shape index: {}]
  %s1 = inlined_call_operand.vmem [shape: f32[6,256], index: 1, kind: input, shape index: {}]
  %s2 = inlined_call_operand.vmem [shape: f32[6,256], index: 2, kind: input, shape index: {}]
  %s3 = inlined_call_operand.vmem [shape: f32[6,256], index: 3, kind: output, shape index: {0}]
  %s4 = inlined_call_operand.vmem [shape: f32[6,256], index: 4, kind: output, shape index: {1}]
  %5 = xla_tuple %s3, %s4
  %s6 = sld [smem:[#allocation0]]
  $region30: #{soft_gumbel_mask_modulate.3} parent=0
    _
  %s8 = ssub.s32 1, %s6
  %s9 = scalar_select 0, %s8, %s6
  // Predicated region
  $region2: #{soft_gumbel_mask_modulate.3} parent=0 // pred_check
    _
  $region3: #{soft_gumbel_mask_modulate.3} parent=0 // pred_check_branch
    %11 = sbr.rel (0) target = $region5
  $region4: #{soft_gumbel_mask_modulate.3} parent=0 // pred_region
    _
  $region5: #{soft_gumbel_mask_modulate.3} parent=0 // pred_fallthru
    _
  // Predicated region
  $region6: #{soft_gumbel_mask_modulate.3} parent=0 // pred_check
    _
  $region7: #{soft_gumbel_mask_modulate.3} parent=0 // pred_check_branch
    %13 = sbr.rel (0) target = $region9
  $region8: #{soft_gumbel_mask_modulate.3} parent=0 // pred_region
    _
  $region9: #{soft_gumbel_mask_modulate.3} parent=0 // pred_fallthru
    _
  // Predicated region
  $region10: #{soft_gumbel_mask_modulate.3} parent=0 // pred_check
    _
  $region11: #{soft_gumbel_mask_modulate.3} parent=0 // pred_check_branch
    %15 = sbr.rel (0) target = $region13
  $region12: #{soft_gumbel_mask_modulate.3} parent=0 // pred_region
    _
  $region13: #{soft_gumbel_mask_modulate.3} parent=0 // pred_fallthru
    _
  %v16 = vld [vmem:[%s0] sm:$0x3]
  %v17 = vld [vmem:[%s1] sm:$0x3f]
  %v18 = vld [vmem:[%s1 + $0x8] sm:$0x3f]
  %v20 = vperm.slane %v16, 0
  %v21 = vperm.slane %v16, 1
  %v24 = vmul.f32 %v17, %v20
  %v25 = vmul.f32 %v18, %v21
  %26 = vst [vmem:[%s3] sm:$0x3f] %v24
  %27 = vst [vmem:[%s3 + $0x8] sm:$0x3f] %v25
  %v28 = vld [vmem:[%s2] sm:$0x3f]
  %v29 = vld [vmem:[%s2 + $0x8] sm:$0x3f]
  %v30 = vmul.f32 %v28, %v20
  %v31 = vmul.f32 %v29, %v21
  %32 = vst [vmem:[%s4] sm:$0x3f] %v30
  %33 = vst [vmem:[%s4 + $0x8] sm:$0x3f] %v31
  // Predicated region
  $region14: #{soft_gumbel_mask_modulate.3} parent=0 // pred_check
    _
  $region15: #{soft_gumbel_mask_modulate.3} parent=0 // pred_check_branch
    %35 = sbr.rel (0) target = $region17
  $region16: #{soft_gumbel_mask_modulate.3} parent=0 // pred_region
    _
  $region17: #{soft_gumbel_mask_modulate.3} parent=0 // pred_fallthru
    _
  // Predicated region
  $region18: #{soft_gumbel_mask_modulate.3} parent=0 // pred_check
    _
  $region19: #{soft_gumbel_mask_modulate.3} parent=0 // pred_check_branch
    %37 = sbr.rel (0) target = $region21
  $region20: #{soft_gumbel_mask_modulate.3} parent=0 // pred_region
    _
  $region21: #{soft_gumbel_mask_modulate.3} parent=0 // pred_fallthru
    _
  // Predicated region
  $region22: #{soft_gumbel_mask_modulate.3} parent=0 // pred_check
    _
  $region23: #{soft_gumbel_mask_modulate.3} parent=0 // pred_check_branch
    %39 = sbr.rel (0) target = $region25
  $region24: #{soft_gumbel_mask_modulate.3} parent=0 // pred_region
    _
  $region25: #{soft_gumbel_mask_modulate.3} parent=0 // pred_fallthru
    _
  // Predicated region
  $region26: #{soft_gumbel_mask_modulate.3} parent=0 // pred_check
    _
  $region27: #{soft_gumbel_mask_modulate.3} parent=0 // pred_check_branch
    %41 = sbr.rel (0) target = $region29
  $region28: #{soft_gumbel_mask_modulate.3} parent=0 // pred_region
    _
  $region29: #{soft_gumbel_mask_modulate.3} parent=0 // pred_fallthru
    _

// kernel: soft_gumbel_mask_modulate.2
$region0: #{soft_gumbel_mask_modulate.2}
  #allocation0 [shape = 'u32[]', space=smem, size = 0x4, offset = 0x4, fixed_abs, tag = 'smem constant byte address 0x4 - core index']
  #allocation1 [shape = 'u32[72,128]{1,0:T(1,128)}', space=vmem, size = 0x9000, scoped, tag = 'internal scratch']
  %s0 = inlined_call_operand.hbm [shape: f32[16,16], index: 0, kind: input, shape index: {}]
  %s1 = inlined_call_operand.vmem [shape: f32[16,16], index: 1, kind: input, shape index: {}]
  %s2 = inlined_call_operand.vmem [shape: f32[16,1], index: 2, kind: input, shape index: {}]
  %s3 = inlined_call_operand.vmem [shape: f32[1,16], index: 3, kind: input, shape index: {}]
  %s4 = inlined_call_operand.vmem [shape: f32[16,16], index: 4, kind: output, shape index: {}]
  %s5 = sld [smem:[#allocation0]]
  $region30: #{soft_gumbel_mask_modulate.2} parent=0
    _
  %s7 = ssub.s32 1, %s5
  %s8 = scalar_select 0, %s7, %s5
  $region1: #{soft_gumbel_mask_modulate.2} parent=0
    #allocation2 [shape = 'u8[8192]{0}', space=vmem, size = 0x2000, scoped, tag = 'input window, operand 0, single buffered']
    #allocation3 [shape = 's32[1]{0}', space=sflag, size = 0x4, scoped, tag = 'scoped memory for soft_gumbel_mask_modulate.2']
    %9 = vsyncpa [#allocation3], 0
    // Predicated region
    $region2: #{soft_gumbel_mask_modulate.2} parent=1 // pred_check
      _
    $region3: #{soft_gumbel_mask_modulate.2} parent=1 // pred_check_branch
      %11 = sbr.rel (0) target = $region5
    $region4: #{soft_gumbel_mask_modulate.2} parent=1 // pred_region
      %13 = vsyncadd [#allocation3], 0
      %s14 = sshll.u32 %s0, 4
      %s15 = int_to_ptr.hbm [resolvable:$true] %s14
      %s16 = sshll.u32 [#allocation2], 4
      %s17 = int_to_ptr.vmem [resolvable:$true] %s16
      %22 = dma.hbm_to_vmem [thread:$0]  %s15, 256, %s17, [#allocation3], 128, 128, 8
    $region5: #{soft_gumbel_mask_modulate.2} parent=1 // pred_fallthru
      _
    // Predicated region
    $region6: #{soft_gumbel_mask_modulate.2} parent=1 // pred_check
      _
    $region7: #{soft_gumbel_mask_modulate.2} parent=1 // pred_check_branch
      %24 = sbr.rel (0) target = $region9
    $region8: #{soft_gumbel_mask_modulate.2} parent=1 // pred_region
      _
    $region9: #{soft_gumbel_mask_modulate.2} parent=1 // pred_fallthru
      _
    // Predicated region
    $region10: #{soft_gumbel_mask_modulate.2} parent=1 // pred_check
      _
    $region11: #{soft_gumbel_mask_modulate.2} parent=1 // pred_check_branch
      %26 = sbr.rel (0) target = $region13
    $region12: #{soft_gumbel_mask_modulate.2} parent=1 // pred_region
      _
    $region13: #{soft_gumbel_mask_modulate.2} parent=1 // pred_fallthru
      _
    // Predicated region
    $region14: #{soft_gumbel_mask_modulate.2} parent=1 // pred_check
      _
    $region15: #{soft_gumbel_mask_modulate.2} parent=1 // pred_check_branch
      %28 = sbr.rel (0) target = $region17
    $region16: #{soft_gumbel_mask_modulate.2} parent=1 // pred_region
      _
    $region17: #{soft_gumbel_mask_modulate.2} parent=1 // pred_fallthru
      _
    // Predicated region
    $region18: #{soft_gumbel_mask_modulate.2} parent=1 // pred_check
      _
    $region19: #{soft_gumbel_mask_modulate.2} parent=1 // pred_check_branch
      %30 = sbr.rel (0) target = $region21
    $region20: #{soft_gumbel_mask_modulate.2} parent=1 // pred_region
      %32 = dma.done [#allocation3], 256
    $region21: #{soft_gumbel_mask_modulate.2} parent=1 // pred_fallthru
      _
    %v33 = vld [vmem:[#allocation2] sm:$0xff]
    %v34 = vld [vmem:[#allocation2 + $0x8] sm:$0xff]
    %v35 = vadd.f32 %v33, 2.0
    %v36 = vadd.f32 %v34, 2.0
    %v37 = vand.u32 2147483647, %v35
    %v38 = vrcp.pop 4.0
    %v39 = vmul.f32 4.0, %v38
    %v40 = vsub.f32 1.0, %v39
    %v41 = vmul.f32 %v38, %v40
    %v42 = vadd.f32 %v38, %v41
    %vm43 = vweird.f32 %v38
    %v44 = vsel %vm43, %v38, %v42
    %v45 = vmul.f32 %v37, %v44
    %v46 = vfloor.f32 %v45
    %v47 = vmul.f32 %v46, 4.0
    %v48 = vsub.f32 %v37, %v47
    %vm49 = vcmp.eq.f32.partialorder %v48, 4.0
    %v50 = vsel %vm49, 0.0, %v48
    %v51 = vand.u32 2147483647, %v50
    %v52 = vand.u32 %v35, 2147483648
    %v53 = vor.u32 %v51, %v52
    %v54 = vand.u32 2147483647, %v36
    %v55 = vrcp.pop 4.0
    %v56 = vmul.f32 4.0, %v55
    %v57 = vsub.f32 1.0, %v56
    %v58 = vmul.f32 %v55, %v57
    %v59 = vadd.f32 %v55, %v58
    %vm60 = vweird.f32 %v55
    %v61 = vsel %vm60, %v55, %v59
    %v62 = vmul.f32 %v54, %v61
    %v63 = vfloor.f32 %v62
    %v64 = vmul.f32 %v63, 4.0
    %v65 = vsub.f32 %v54, %v64
    %vm66 = vcmp.eq.f32.partialorder %v65, 4.0
    %v67 = vsel %vm66, 0.0, %v65
    %v68 = vand.u32 2147483647, %v67
    %v69 = vand.u32 %v36, 2147483648
    %v70 = vor.u32 %v68, %v69
    %vm71 = vcmp.ne.f32.partialorder %v53, 0.0
    %vm72 = vcmp.ne.f32.partialorder %v70, 0.0
    %vm73 = vcmp.lt.f32.partialorder %v53, 0.0
    %vm74 = vcmp.lt.f32.partialorder %v70, 0.0
    %vm75 = vmand %vm73, %vm71
    %vm76 = vmand %vm74, %vm72
    %v77 = vadd.f32 %v53, 4.0
    %v78 = vadd.f32 %v70, 4.0
    %v79 = vsel %vm75, %v77, %v53
    %v80 = vsel %vm76, %v78, %v70
    %v81 = vsub.f32 %v79, 2.0
    %v82 = vsub.f32 %v80, 2.0
    %v83 = vsub.f32 %v81, 1.0
    %v84 = vsub.f32 %v82, 1.0
    %v85 = vadd.f32 %v83, 2.0
    %v86 = vadd.f32 %v84, 2.0
    %v87 = vand.u32 2147483647, %v85
    %v88 = vrcp.pop 4.0
    %v89 = vmul.f32 4.0, %v88
    %v90 = vsub.f32 1.0, %v89
    %v91 = vmul.f32 %v88, %v90
    %v92 = vadd.f32 %v88, %v91
    %vm93 = vweird.f32 %v88
    %v94 = vsel %vm93, %v88, %v92
    %v95 = vmul.f32 %v87, %v94
    %v96 = vfloor.f32 %v95
    %v97 = vmul.f32 %v96, 4.0
    %v98 = vsub.f32 %v87, %v97
    %vm99 = vcmp.eq.f32.partialorder %v98, 4.0
    %v100 = vsel %vm99, 0.0, %v98
    %v101 = vand.u32 2147483647, %v100
    %v102 = vand.u32 %v85, 2147483648
    %v103 = vor.u32 %v101, %v102
    %v104 = vand.u32 2147483647, %v86
    %v105 = vrcp.pop 4.0
    %v106 = vmul.f32 4.0, %v105
    %v107 = vsub.f32 1.0, %v106
    %v108 = vmul.f32 %v105, %v107
    %v109 = vadd.f32 %v105, %v108
    %vm110 = vweird.f32 %v105
    %v111 = vsel %vm110, %v105, %v109
    %v112 = vmul.f32 %v104, %v111
    %v113 = vfloor.f32 %v112
    %v114 = vmul.f32 %v113, 4.0
    %v115 = vsub.f32 %v104, %v114
    %vm116 = vcmp.eq.f32.partialorder %v115, 4.0
    %v117 = vsel %vm116, 0.0, %v115
    %v118 = vand.u32 2147483647, %v117
    %v119 = vand.u32 %v86, 2147483648
    %v120 = vor.u32 %v118, %v119
    %vm121 = vcmp.ne.f32.partialorder %v103, 0.0
    %vm122 = vcmp.ne.f32.partialorder %v120, 0.0
    %vm123 = vcmp.lt.f32.partialorder %v103, 0.0
    %vm124 = vcmp.lt.f32.partialorder %v120, 0.0
    %vm125 = vmand %vm123, %vm121
    %vm126 = vmand %vm124, %vm122
    %v127 = vadd.f32 %v103, 4.0
    %v128 = vadd.f32 %v120, 4.0
    %v129 = vsel %vm125, %v127, %v103
    %v130 = vsel %vm126, %v128, %v120
    %v131 = vsub.f32 %v129, 2.0
    %v132 = vsub.f32 %v130, 2.0
    %v133 = vmul.f32 %v131, 0.5
    %v134 = vmul.f32 %v132, 0.5
    %v135 = vmul.f32 %v133, 1.3545649
    %v136 = vmul.f32 %v134, 1.3545649
    %v137 = vxor.u32 %v135, 2147483648
    %v138 = vxor.u32 %v136, 2147483648
    %v139 = vmul.f32 %v137, 1.442695
    %v140 = vpow.pop %v139
    %v141 = vmul.f32 %v138, 1.442695
    %v142 = vpow.pop %v141
    %v143 = vadd.f32 %v140, 1.0
    %v144 = vadd.f32 %v142, 1.0
    %v145 = vrcp.pop %v143
    %v146 = vmul.f32 %v143, %v145
    %v147 = vsub.f32 1.0, %v146
    %v148 = vmul.f32 %v145, %v147
    %v149 = vadd.f32 %v145, %v148
    %vm150 = vweird.f32 %v143
    %vm151 = vweird.f32 %v145
    %vm152 = vmor %vm150, %vm151
    %v153 = vsel %vm152, %v145, %v149
    %v154 = vand.u32 2147483647, %v143
    %vm155 = vcmp.eq.f32.partialorder %v154, 8.507059e+37
    %v156 = vand.u32 %v143, 2147483648
    %v157 = vor.u32 1.1754944e-38, %v156
    %v158 = vsel %vm155, %v157, %v153
    %v159 = vmul.f32 1.0, %v158
    %v160 = vrcp.pop %v144
    %v161 = vmul.f32 %v144, %v160
    %v162 = vsub.f32 1.0, %v161
    %v163 = vmul.f32 %v160, %v162
    %v164 = vadd.f32 %v160, %v163
    %vm165 = vweird.f32 %v144
    %vm166 = vweird.f32 %v160
    %vm167 = vmor %vm165, %vm166
    %v168 = vsel %vm167, %v160, %v164
    %v169 = vand.u32 2147483647, %v144
    %vm170 = vcmp.eq.f32.partialorder %v169, 8.507059e+37
    %v171 = vand.u32 %v144, 2147483648
    %v172 = vor.u32 1.1754944e-38, %v171
    %v173 = vsel %vm170, %v172, %v168
    %v174 = vmul.f32 1.0, %v173
    %v175 = vsub.f32 1.0, %v159
    %v176 = vsub.f32 1.0, %v174
    %v177 = vmul.f32 %v159, %v175
    %v178 = vmul.f32 %v174, %v176
    %v179 = vmul.f32 %v177, 4.0
    %v180 = vmul.f32 %v178, 4.0
    %v181 = vmul.f32 %v179, 300.0
    %v182 = vmul.f32 %v180, 300.0
    %v183 = vmul.f32 %v181, 1.3545649
    %v184 = vmul.f32 %v182, 1.3545649
    %v185 = vld [vmem:[%s1] sm:$0xff]
    %v186 = vld [vmem:[%s1 + $0x8] sm:$0xff]
    %v187 = vadd.f32 %v183, %v185
    %v188 = vadd.f32 %v184, %v186
    %v189 = vsub.f32 %v81, -1.0
    %v190 = vsub.f32 %v82, -1.0
    %v191 = vadd.f32 %v189, 2.0
    %v192 = vadd.f32 %v190, 2.0
    %v193 = vand.u32 2147483647, %v191
    %v194 = vrcp.pop 4.0
    %v195 = vmul.f32 4.0, %v194
    %v196 = vsub.f32 1.0, %v195
    %v197 = vmul.f32 %v194, %v196
    %v198 = vadd.f32 %v194, %v197
    %vm199 = vweird.f32 %v194
    %v200 = vsel %vm199, %v194, %v198
    %v201 = vmul.f32 %v193, %v200
    %v202 = vfloor.f32 %v201
    %v203 = vmul.f32 %v202, 4.0
    %v204 = vsub.f32 %v193, %v203
    %vm205 = vcmp.eq.f32.partialorder %v204, 4.0
    %v206 = vsel %vm205, 0.0, %v204
    %v207 = vand.u32 2147483647, %v206
    %v208 = vand.u32 %v191, 2147483648
    %v209 = vor.u32 %v207, %v208
    %v210 = vand.u32 2147483647, %v192
    %v211 = vrcp.pop 4.0
    %v212 = vmul.f32 4.0, %v211
    %v213 = vsub.f32 1.0, %v212
    %v214 = vmul.f32 %v211, %v213
    %v215 = vadd.f32 %v211, %v214
    %vm216 = vweird.f32 %v211
    %v217 = vsel %vm216, %v211, %v215
    %v218 = vmul.f32 %v210, %v217
    %v219 = vfloor.f32 %v218
    %v220 = vmul.f32 %v219, 4.0
    %v221 = vsub.f32 %v210, %v220
    %vm222 = vcmp.eq.f32.partialorder %v221, 4.0
    %v223 = vsel %vm222, 0.0, %v221
    %v224 = vand.u32 2147483647, %v223
    %v225 = vand.u32 %v192, 2147483648
    %v226 = vor.u32 %v224, %v225
    %vm227 = vcmp.ne.f32.partialorder %v209, 0.0
    %vm228 = vcmp.ne.f32.partialorder %v226, 0.0
    %vm229 = vcmp.lt.f32.partialorder %v209, 0.0
    %vm230 = vcmp.lt.f32.partialorder %v226, 0.0
    %vm231 = vmand %vm229, %vm227
    %vm232 = vmand %vm230, %vm228
    %v233 = vadd.f32 %v209, 4.0
    %v234 = vadd.f32 %v226, 4.0
    %v235 = vsel %vm231, %v233, %v209
    %v236 = vsel %vm232, %v234, %v226
    %v237 = vsub.f32 %v235, 2.0
    %v238 = vsub.f32 %v236, 2.0
    %v239 = vmul.f32 %v237, 0.5
    %v240 = vmul.f32 %v238, 0.5
    %v241 = vmul.f32 %v239, 1.3545649
    %v242 = vmul.f32 %v240, 1.3545649
    %v243 = vxor.u32 %v241, 2147483648
    %v244 = vxor.u32 %v242, 2147483648
    %v245 = vmul.f32 %v243, 1.442695
    %v246 = vpow.pop %v245
    %v247 = vmul.f32 %v244, 1.442695
    %v248 = vpow.pop %v247
    %v249 = vadd.f32 %v246, 1.0
    %v250 = vadd.f32 %v248, 1.0
    %v251 = vrcp.pop %v249
    %v252 = vmul.f32 %v249, %v251
    %v253 = vsub.f32 1.0, %v252
    %v254 = vmul.f32 %v251, %v253
    %v255 = vadd.f32 %v251, %v254
    %vm256 = vweird.f32 %v249
    %vm257 = vweird.f32 %v251
    %vm258 = vmor %vm256, %vm257
    %v259 = vsel %vm258, %v251, %v255
    %v260 = vand.u32 2147483647, %v249
    %vm261 = vcmp.eq.f32.partialorder %v260, 8.507059e+37
    %v262 = vand.u32 %v249, 2147483648
    %v263 = vor.u32 1.1754944e-38, %v262
    %v264 = vsel %vm261, %v263, %v259
    %v265 = vmul.f32 1.0, %v264
    %v266 = vrcp.pop %v250
    %v267 = vmul.f32 %v250, %v266
    %v268 = vsub.f32 1.0, %v267
    %v269 = vmul.f32 %v266, %v268
    %v270 = vadd.f32 %v266, %v269
    %vm271 = vweird.f32 %v250
    %vm272 = vweird.f32 %v266
    %vm273 = vmor %vm271, %vm272
    %v274 = vsel %vm273, %v266, %v270
    %v275 = vand.u32 2147483647, %v250
    %vm276 = vcmp.eq.f32.partialorder %v275, 8.507059e+37
    %v277 = vand.u32 %v250, 2147483648
    %v278 = vor.u32 1.1754944e-38, %v277
    %v279 = vsel %vm276, %v278, %v274
    %v280 = vmul.f32 1.0, %v279
    %v281 = vsub.f32 1.0, %v265
    %v282 = vsub.f32 1.0, %v280
    %v283 = vmul.f32 %v265, %v281
    %v284 = vmul.f32 %v280, %v282
    %v285 = vmul.f32 %v283, 4.0
    %v286 = vmul.f32 %v284, 4.0
    %v287 = vmul.f32 %v285, 300.0
    %v288 = vmul.f32 %v286, 300.0
    %v289 = vmul.f32 %v287, 1.3545649
    %v290 = vmul.f32 %v288, 1.3545649
    %vm291 = vcmp.gt.f32.partialorder %v187, %v289
    %vm292 = vcmp.gt.f32.partialorder %v188, %v290
    %v293 = vld [vmem:[%s2] sm:$0xff]
    %v294 = vld [vmem:[%s2 + $0x8] sm:$0xff]
    %v295 = vld [vmem:[%s3] sm:$0x1]
    %v296 = vmul.f32 %v293, %v293
    %v297 = vmul.f32 %v294, %v294
    %v298 = vmul.f32 %v295, %v295
    %300 = vset.pattern.permute.xlu0 0
    %301 = vperm.xlu0 %300, %v296
    %v302 = vpop.permute.xlu0 %301
    %305 = vset.pattern.permute.xlu0 0
    %306 = vperm.xlu0 %305, %v297
    %v307 = vpop.permute.xlu0 %306
    %v310 = vperm.slane %v298, 0
    %v312 = vadd.f32 %v302, %v310
    %v313 = vadd.f32 %v307, %v310
    %v314 = vrsqrt.pop %v312
    %v315 = vmul.f32 %v314, %v312
    %v316 = vmul.f32 %v315, %v314
    %v317 = vmul.f32 0.5, %v316
    %v318 = vsub.f32 1.5, %v317
    %v319 = vmul.f32 %v314, %v318
    %v320 = vmul.f32 %v312, %v319
    %vm321 = vcmp.eq.f32.partialorder %v312, inf
    %v322 = vsel %vm321, %v312, %v320
    %vm323 = vcmp.eq.f32.partialorder %v312, 0.0
    %v324 = vand.u32 %v312, 2147483648
    %v325 = vsel %vm323, %v324, %v322
    %v326 = vrsqrt.pop %v313
    %v327 = vmul.f32 %v326, %v313
    %v328 = vmul.f32 %v327, %v326
    %v329 = vmul.f32 0.5, %v328
    %v330 = vsub.f32 1.5, %v329
    %v331 = vmul.f32 %v326, %v330
    %v332 = vmul.f32 %v313, %v331
    %vm333 = vcmp.eq.f32.partialorder %v313, inf
    %v334 = vsel %vm333, %v313, %v332
    %vm335 = vcmp.eq.f32.partialorder %v313, 0.0
    %v336 = vand.u32 %v313, 2147483648
    %v337 = vsel %vm335, %v336, %v334
    %vm338 = vcmp.le.f32.partialorder %v325, 0.075
    %vm339 = vcmp.le.f32.partialorder %v337, 0.075
    %vm340 = vmand %vm291, %vm338
    %vm341 = vmand %vm292, %vm339
    %v342 = vsel %vm340, 1.0, 0.0
    %v343 = vsel %vm341, 1.0, 0.0
    %vm344 = vcmask 130048
    %345 = vst.msk [vmem:[%s4] sm:$0xff] %vm344, %v342
    %346 = vst.msk [vmem:[%s4 + $0x8] sm:$0xff] %vm344, %v343
    // Predicated region
    $region22: #{soft_gumbel_mask_modulate.2} parent=1 // pred_check
      _
    $region23: #{soft_gumbel_mask_modulate.2} parent=1 // pred_check_branch
      %348 = sbr.rel (0) target = $region25
    $region24: #{soft_gumbel_mask_modulate.2} parent=1 // pred_region
      _
    $region25: #{soft_gumbel_mask_modulate.2} parent=1 // pred_fallthru
      _
    // Predicated region
    $region26: #{soft_gumbel_mask_modulate.2} parent=1 // pred_check
      _
    $region27: #{soft_gumbel_mask_modulate.2} parent=1 // pred_check_branch
      %350 = sbr.rel (0) target = $region29
    $region28: #{soft_gumbel_mask_modulate.2} parent=1 // pred_region
      _
    $region29: #{soft_gumbel_mask_modulate.2} parent=1 // pred_fallthru
      _
    %351 = vsyncpa [#allocation3], 1

</llo_original>
